<compile_context>
chip_gen: v7x
topology: tpu7x:2x2x1
jax: 0.10.0
libtpu: 0.0.40
codegen_flags: <defaults>
</compile_context>

<pallas_src>
import functools
import math

import jax
import jax.numpy as jnp
from jax import lax
from jax.experimental import pallas as pl
from jax.experimental.pallas import tpu as pltpu


def _enpm_kernel(x_ref, w_ref, out_ref,
                 wn_ref, colsum_ref, margin_ref, minsim_ref, abmin_ref,
                 *, n, nh):
    step = pl.program_id(0)
    nsteps = pl.num_programs(0)
    tm = x_ref.shape[0]
    nblock = w_ref.shape[0]

    # ---- step 0: normalise the weight once into resident scratch; zero accumulators.
    @pl.when(step == 0)
    def _init():
        w = w_ref[...].astype(jnp.float32)
        w_ss = jnp.sum(w * w, axis=1, keepdims=True)
        # w / max(||w||, 1e-12)  ==  w * rsqrt(max(||w||^2, 1e-24))
        wn_ref[...] = w * lax.rsqrt(jnp.maximum(w_ss, 1e-24))
        colsum_ref[...] = jnp.zeros_like(colsum_ref)
        margin_ref[...] = jnp.zeros_like(margin_ref)
        minsim_ref[...] = jnp.zeros_like(minsim_ref)
        abmin_ref[...] = jnp.zeros_like(abmin_ref)

    # ---- per-tile compute.
    x = x_ref[...].astype(jnp.float32)                       # [TM, D]
    x_ss = jnp.sum(x * x, axis=1, keepdims=True)
    xn = x * lax.rsqrt(jnp.maximum(x_ss, 1e-24))             # F.normalize(x, dim=1)

    # att tile = xn @ wn.T  (MXU), f32 accumulation.
    att = lax.dot_general(xn, wn_ref[...],
                          dimension_numbers=(((1,), (1,)), ((), ())),
                          preferred_element_type=jnp.float32)  # [TM, NBlock]

    top1 = jnp.max(att, axis=1, keepdims=True)                # needed for both halves

    row0 = step * tm
    grow = row0 + lax.broadcasted_iota(jnp.int32, (tm, 1), 0)  # global row index

    # First-half rows: top-2 margin, min_sim and the softmax column-sum (u_loss).
    @pl.when(row0 < nh)
    def _first_half():
        fmask = (grow < nh).astype(jnp.float32)               # [TM, 1]
        col = lax.broadcasted_iota(jnp.int32, att.shape, 1)
        # topk(.,2) values: top1 plus max with the first argmax column masked out.
        first_idx = jnp.min(jnp.where(att == top1, col, nblock),
                            axis=1, keepdims=True)
        top2 = jnp.max(jnp.where(col == first_idx, -jnp.inf, att),
                       axis=1, keepdims=True)
        margin = top1 - top2
        # softmax over NBlock; row max is exactly top1, reuse it.
        e = jnp.exp(att - top1)
        rsum = jnp.sum(e, axis=1, keepdims=True)
        p = e * pl.reciprocal(rsum, approx=True)
        colsum_ref[...] += jnp.sum(p * fmask, axis=0, keepdims=True)
        margin_ref[...] += jnp.sum(margin * fmask, axis=0, keepdims=True)
        minsim_ref[...] += jnp.sum(top1 * fmask, axis=0, keepdims=True)

    # Second-half rows: only top1 (ab_min) is needed — no top-2 / softmax work.
    @pl.when(row0 + tm > nh)
    def _second_half():
        smask = (grow >= nh).astype(jnp.float32)
        abmin_ref[...] += jnp.sum(top1 * smask, axis=0, keepdims=True)

    # ---- last step: finalise the three losses, one full (8, 128) store.
    @pl.when(step == nsteps - 1)
    def _fini():
        inv_nh = jnp.float32(1.0 / nh)
        inv_n2 = jnp.float32(1.0 / (n - nh))
        tmp = colsum_ref[...] * inv_nh                         # [1, NBlock]
        u_loss = jnp.sqrt(jnp.sum(tmp * tmp, axis=1, keepdims=True))
        loss0 = 2.0 - margin_ref[...] * inv_nh
        loss1 = 2.0 - minsim_ref[...] * inv_nh + abmin_ref[...] * inv_n2
        loss2 = 0.5 * u_loss
        rows = lax.broadcasted_iota(jnp.int32, out_ref.shape, 0)
        out_ref[...] = jnp.where(rows == 0, loss0,
                        jnp.where(rows == 1, loss1,
                         jnp.where(rows == 2, loss2, 0.0)))


def _pick_tile(n, tm_max=512):
    for tm in (512, 256, 128, 64, 32, 16, 8):
        if tm <= tm_max and n % tm == 0:
            return tm
    return n  # full-extent block is always legal


def enpm_forward(x, weight, *, tm=None):
    """Pallas implementation of ENPM.forward(x, mask=None). Returns 3 scalars."""
    n, d = x.shape
    nblock, d2 = weight.shape
    assert d == d2 and n >= 2 and nblock >= 2
    nh = n // 2
    if tm is None:
        tm = _pick_tile(n)
    assert n % tm == 0
    grid = (n // tm,)

    # rough VMEM budget (x tiles double-buffered, weight + wn resident, att tile)
    est = 4 * (2 * tm * d + 2 * nblock * d + 2 * tm * nblock + 2 * nblock + 4 * 8 * 128)
    vmem_limit = int(min(max(2 * est, 4 << 20), 64 << 20))

    kernel = functools.partial(_enpm_kernel, n=n, nh=nh)
    out = pl.pallas_call(
        kernel,
        out_shape=jax.ShapeDtypeStruct((8, 128), jnp.float32),
        grid_spec=pltpu.PrefetchScalarGridSpec(
            num_scalar_prefetch=0,
            grid=grid,
            in_specs=[
                pl.BlockSpec((tm, d), lambda i: (i, 0)),        # x: tiled over rows
                pl.BlockSpec((nblock, d), lambda i: (0, 0)),    # weight: resident
            ],
            out_specs=pl.BlockSpec((8, 128), lambda i: (0, 0)),
            scratch_shapes=[
                pltpu.VMEM((nblock, d), jnp.float32),   # wn (normalised weight), computed once
                pltpu.VMEM((1, nblock), jnp.float32),   # per-column softmax sum (u_loss)
                pltpu.VMEM((1, 1), jnp.float32),        # sum(margin)   over first half
                pltpu.VMEM((1, 1), jnp.float32),        # sum(top1)     over first half
                pltpu.VMEM((1, 1), jnp.float32),        # sum(top1)     over second half
            ]),
        compiler_params=pltpu.CompilerParams(
            dimension_semantics=("arbitrary",),          # N axis carries accumulators
            vmem_limit_bytes=vmem_limit),
    )(x, weight)
    return out[0, 0], out[1, 0], out[2, 0]


def enpm_forward_ref(x, weight):
    """Pure-JAX reference of the no-mask branch (for correctness checking)."""
    xn = x / jnp.maximum(jnp.linalg.norm(x, axis=1, keepdims=True), 1e-12)
    wn = weight / jnp.maximum(jnp.linalg.norm(weight, axis=1, keepdims=True), 1e-12)
    att = xn @ wn.T
    top2 = jax.lax.top_k(att, 2)[0]
    n = x.shape[0]
    nh = n // 2
    p = jax.nn.softmax(att[:nh, :], axis=1)
    tmp = jnp.mean(p, axis=0)
    u_loss = jnp.linalg.norm(tmp)
    margin = top2[:nh, 0] - top2[:nh, 1]
    return (2.0 - jnp.mean(margin),
            2.0 - jnp.mean(top2[:nh, 0]) + jnp.mean(top2[nh:, 0]),
            0.5 * u_loss)


if __name__ == "__main__":
    base_key = jax.random.PRNGKey(0)

    def run_case(case, n, dim, nblock, tm):
        key = jax.random.fold_in(base_key, case)
        kx, kw = jax.random.split(key)
        # reset_parameters(): uniform(-stdv, stdv) with stdv = 1/sqrt(dim)
        stdv = 1.0 / math.sqrt(dim)
        weight = jax.random.uniform(kw, (nblock, dim), jnp.float32,
                                    minval=-stdv, maxval=stdv)
        x = jax.random.normal(kx, (n, dim), dtype=jnp.float32)

        got = enpm_forward(x, weight, tm=tm)
        jax.block_until_ready(got)
        ref = enpm_forward_ref(x, weight)
        for i, (g, r) in enumerate(zip(got, ref)):
            # loss2 uses the approximate EUP reciprocal in the softmax -> looser rtol.
            rtol = 3e-3 if i == 2 else 5e-4
            atol = 2e-4
            assert jnp.allclose(g, r, rtol=rtol, atol=atol), (case, i, g, r)

    # Multi-tile grid: tiles 0,1 hold the first-half rows, tiles 2,3 the second half.
    run_case(case=0, n=64, dim=256, nblock=128, tm=16)
    # nh=12 falls inside tile 1: exercises the masked mixed first/second-half path.
    run_case(case=1, n=24, dim=256, nblock=128, tm=8)

    print("KERNEL_OK")
</pallas_src>

<mosaic_0001>
module attributes {stable_mosaic.version = 11 : i64} {
  func.func @_enpm_kernel(%arg0: i32, %arg1: memref<16x256xf32, #tpu.memory_space<vmem>>, %arg2: memref<128x256xf32, #tpu.memory_space<vmem>>, %arg3: memref<8x128xf32, #tpu.memory_space<vmem>>, %arg4: memref<128x256xf32, #tpu.memory_space<vmem>>, %arg5: memref<1x128xf32, #tpu.memory_space<vmem>>, %arg6: memref<1x1xf32, #tpu.memory_space<vmem>>, %arg7: memref<1x1xf32, #tpu.memory_space<vmem>>, %arg8: memref<1x1xf32, #tpu.memory_space<vmem>>) attributes {dimension_semantics = [#tpu.dimension_semantics<arbitrary>], iteration_bounds = array<i64: 4>, scalar_prefetch = 0 : i64, scratch_operands = 5 : i64, tpu.core_type = #tpu.core_type<tc>, window_params = [{transform_indices = @transform_0, window_bounds = array<i64: 16, 256>}, {pipeline_mode = #tpu.pipeline_mode<synchronous>, transform_indices = @transform_1, window_bounds = array<i64: 128, 256>}, {pipeline_mode = #tpu.pipeline_mode<synchronous>, transform_indices = @transform_2, window_bounds = array<i64: 8, 128>}]} {
    %c0_i32 = arith.constant 0 : i32
    %0 = arith.cmpi eq, %arg0, %c0_i32 : i32
    %1 = arith.extui %0 : i1 to i32
    %c0_i32_0 = arith.constant 0 : i32
    %2 = arith.cmpi ne, %1, %c0_i32_0 : i32
    scf.if %2 {
      %c0_12 = arith.constant 0 : index
      %c0_13 = arith.constant 0 : index
      %30 = vector.load %arg2[%c0_12, %c0_13] : memref<128x256xf32, #tpu.memory_space<vmem>>, vector<128x256xf32>
      %31 = arith.mulf %30, %30 : vector<128x256xf32>
      %cst_14 = arith.constant dense<0.000000e+00> : vector<128xf32>
      %32 = vector.multi_reduction <add>, %31, %cst_14 [1] : vector<128x256xf32> to vector<128xf32>
      %33 = vector.shape_cast %32 : vector<128xf32> to vector<128x1xf32>
      %cst_15 = arith.constant 1.000000e-24 : f32
      %34 = vector.broadcast %cst_15 : f32 to vector<128x1xf32>
      %35 = arith.maximumf %33, %34 : vector<128x1xf32>
      %36 = math.rsqrt %35 : vector<128x1xf32>
      %37 = vector.broadcast %36 : vector<128x1xf32> to vector<128x256xf32>
      %38 = arith.mulf %30, %37 : vector<128x256xf32>
      %c0_16 = arith.constant 0 : index
      %c0_17 = arith.constant 0 : index
      %39 = vector.load %arg4[%c0_16, %c0_17] : memref<128x256xf32, #tpu.memory_space<vmem>>, vector<128x256xf32>
      tpu.vector_store %arg4[%c0_16, %c0_17], %38 {strides = array<i32>} : memref<128x256xf32, #tpu.memory_space<vmem>>, vector<128x256xf32>,
      %cst_18 = arith.constant 0.000000e+00 : f32
      %40 = vector.broadcast %cst_18 : f32 to vector<1x128xf32>
      %c0_19 = arith.constant 0 : index
      %c0_20 = arith.constant 0 : index
      %41 = vector.load %arg5[%c0_19, %c0_20] : memref<1x128xf32, #tpu.memory_space<vmem>>, vector<1x128xf32>
      tpu.vector_store %arg5[%c0_19, %c0_20], %40 {strides = array<i32>} : memref<1x128xf32, #tpu.memory_space<vmem>>, vector<1x128xf32>,
      %cst_21 = arith.constant 0.000000e+00 : f32
      %42 = vector.broadcast %cst_21 : f32 to vector<1x1xf32>
      %c0_22 = arith.constant 0 : index
      %c0_23 = arith.constant 0 : index
      %43 = vector.load %arg6[%c0_22, %c0_23] : memref<1x1xf32, #tpu.memory_space<vmem>>, vector<1x1xf32>
      tpu.vector_store %arg6[%c0_22, %c0_23], %42 {strides = array<i32>} : memref<1x1xf32, #tpu.memory_space<vmem>>, vector<1x1xf32>,
      %cst_24 = arith.constant 0.000000e+00 : f32
      %44 = vector.broadcast %cst_24 : f32 to vector<1x1xf32>
      %c0_25 = arith.constant 0 : index
      %c0_26 = arith.constant 0 : index
      %45 = vector.load %arg7[%c0_25, %c0_26] : memref<1x1xf32, #tpu.memory_space<vmem>>, vector<1x1xf32>
      tpu.vector_store %arg7[%c0_25, %c0_26], %44 {strides = array<i32>} : memref<1x1xf32, #tpu.memory_space<vmem>>, vector<1x1xf32>,
      %cst_27 = arith.constant 0.000000e+00 : f32
      %46 = vector.broadcast %cst_27 : f32 to vector<1x1xf32>
      %c0_28 = arith.constant 0 : index
      %c0_29 = arith.constant 0 : index
      %47 = vector.load %arg8[%c0_28, %c0_29] : memref<1x1xf32, #tpu.memory_space<vmem>>, vector<1x1xf32>
      tpu.vector_store %arg8[%c0_28, %c0_29], %46 {strides = array<i32>} : memref<1x1xf32, #tpu.memory_space<vmem>>, vector<1x1xf32>,
    } else {
    }
    %c0 = arith.constant 0 : index
    %c0_1 = arith.constant 0 : index
    %3 = vector.load %arg1[%c0, %c0_1] : memref<16x256xf32, #tpu.memory_space<vmem>>, vector<16x256xf32>
    %4 = arith.mulf %3, %3 : vector<16x256xf32>
    %cst = arith.constant dense<0.000000e+00> : vector<16xf32>
    %5 = vector.multi_reduction <add>, %4, %cst [1] : vector<16x256xf32> to vector<16xf32>
    %6 = vector.shape_cast %5 : vector<16xf32> to vector<16x1xf32>
    %cst_2 = arith.constant 1.000000e-24 : f32
    %7 = vector.broadcast %cst_2 : f32 to vector<16x1xf32>
    %8 = arith.maximumf %6, %7 : vector<16x1xf32>
    %9 = math.rsqrt %8 : vector<16x1xf32>
    %10 = vector.broadcast %9 : vector<16x1xf32> to vector<16x256xf32>
    %11 = arith.mulf %3, %10 : vector<16x256xf32>
    %c0_3 = arith.constant 0 : index
    %c0_4 = arith.constant 0 : index
    %12 = vector.load %arg4[%c0_3, %c0_4] : memref<128x256xf32, #tpu.memory_space<vmem>>, vector<128x256xf32>
    %cst_5 = arith.constant dense<0.000000e+00> : vector<16x128xf32>
    %13 = tpu.matmul %11, %12, %cst_5 {dimension_numbers = #tpu.dot_dimension_numbers<[1], [1], [0], [0], [0, 0, 1, 0], [], []>} : vector<16x256xf32>, vector<128x256xf32>, vector<16x128xf32> -> vector<16x128xf32>
    %cst_6 = arith.constant dense<0xFF800000> : vector<16xf32>
    %14 = vector.multi_reduction <maximumf>, %13, %cst_6 [1] : vector<16x128xf32> to vector<16xf32>
    %15 = vector.shape_cast %14 : vector<16xf32> to vector<16x1xf32>
    %c16_i32 = arith.constant 16 : i32
    %16 = arith.muli %arg0, %c16_i32 : i32
    %17 = tpu.iota {dimensions = array<i32: 0>} : vector<16x1xi32>
    %18 = vector.broadcast %16 : i32 to vector<16x1xi32>
    %19 = arith.addi %18, %17 : vector<16x1xi32>
    %c32_i32 = arith.constant 32 : i32
    %20 = arith.cmpi slt, %16, %c32_i32 : i32
    %21 = arith.extui %20 : i1 to i32
    %c0_i32_7 = arith.constant 0 : i32
    %22 = arith.cmpi ne, %21, %c0_i32_7 : i32
    scf.if %22 {
      %c32_i32_12 = arith.constant 32 : i32
      %30 = vector.broadcast %c32_i32_12 : i32 to vector<16x1xi32>
      %31 = arith.cmpi slt, %19, %30 : vector<16x1xi32>
      %32 = arith.extui %31 : vector<16x1xi1> to vector<16x1xi32>
      %33 = arith.sitofp %32 : vector<16x1xi32> to vector<16x1xf32>
      %34 = tpu.iota {dimensions = array<i32: 1>} : vector<16x128xi32>
      %35 = vector.broadcast %15 : vector<16x1xf32> to vector<16x128xf32>
      %36 = arith.cmpf oeq, %13, %35 : vector<16x128xf32>
      %c128_i32 = arith.constant 128 : i32
      %37 = vector.broadcast %c128_i32 : i32 to vector<16x128xi32>
      %38 = arith.select %36, %34, %37 : vector<16x128xi1>, vector<16x128xi32>
      %cst_13 = arith.constant dense<2147483647> : vector<16xi32>
      %39 = vector.multi_reduction <minsi>, %38, %cst_13 [1] : vector<16x128xi32> to vector<16xi32>
      %40 = vector.shape_cast %39 : vector<16xi32> to vector<16x1xi32>
      %41 = vector.broadcast %40 : vector<16x1xi32> to vector<16x128xi32>
      %42 = arith.cmpi eq, %34, %41 : vector<16x128xi32>
      %cst_14 = arith.constant 0xFF800000 : f32
      %43 = vector.broadcast %cst_14 : f32 to vector<16x128xf32>
      %44 = arith.select %42, %43, %13 : vector<16x128xi1>, vector<16x128xf32>
      %cst_15 = arith.constant dense<0xFF800000> : vector<16xf32>
      %45 = vector.multi_reduction <maximumf>, %44, %cst_15 [1] : vector<16x128xf32> to vector<16xf32>
      %46 = vector.shape_cast %45 : vector<16xf32> to vector<16x1xf32>
      %47 = arith.subf %15, %46 : vector<16x1xf32>
      %48 = vector.broadcast %15 : vector<16x1xf32> to vector<16x128xf32>
      %49 = arith.subf %13, %48 : vector<16x128xf32>
      %50 = math.exp %49 : vector<16x128xf32>
      %cst_16 = arith.constant dense<0.000000e+00> : vector<16xf32>
      %51 = vector.multi_reduction <add>, %50, %cst_16 [1] : vector<16x128xf32> to vector<16xf32>
      %52 = vector.shape_cast %51 : vector<16xf32> to vector<16x1xf32>
      %53 = tpu.reciprocal %52 {approx = true} : vector<16x1xf32> -> vector<16x1xf32>
      %54 = vector.broadcast %53 : vector<16x1xf32> to vector<16x128xf32>
      %55 = arith.mulf %50, %54 : vector<16x128xf32>
      %c0_17 = arith.constant 0 : index
      %c0_18 = arith.constant 0 : index
      %56 = vector.load %arg5[%c0_17, %c0_18] : memref<1x128xf32, #tpu.memory_space<vmem>>, vector<1x128xf32>
      %57 = vector.broadcast %33 : vector<16x1xf32> to vector<16x128xf32>
      %58 = arith.mulf %55, %57 : vector<16x128xf32>
      %cst_19 = arith.constant dense<0.000000e+00> : vector<128xf32>
      %59 = vector.multi_reduction <add>, %58, %cst_19 [0] : vector<16x128xf32> to vector<128xf32>
      %60 = vector.shape_cast %59 : vector<128xf32> to vector<1x128xf32>
      %61 = arith.addf %56, %60 : vector<1x128xf32>
      %c0_20 = arith.constant 0 : index
      %c0_21 = arith.constant 0 : index
      %62 = vector.load %arg5[%c0_20, %c0_21] : memref<1x128xf32, #tpu.memory_space<vmem>>, vector<1x128xf32>
      tpu.vector_store %arg5[%c0_20, %c0_21], %61 {strides = array<i32>} : memref<1x128xf32, #tpu.memory_space<vmem>>, vector<1x128xf32>,
      %c0_22 = arith.constant 0 : index
      %c0_23 = arith.constant 0 : index
      %63 = vector.load %arg6[%c0_22, %c0_23] : memref<1x1xf32, #tpu.memory_space<vmem>>, vector<1x1xf32>
      %64 = arith.mulf %47, %33 : vector<16x1xf32>
      %cst_24 = arith.constant dense<0.000000e+00> : vector<1xf32>
      %65 = vector.multi_reduction <add>, %64, %cst_24 [0] : vector<16x1xf32> to vector<1xf32>
      %66 = vector.shape_cast %65 : vector<1xf32> to vector<1x1xf32>
      %67 = arith.addf %63, %66 : vector<1x1xf32>
      %c0_25 = arith.constant 0 : index
      %c0_26 = arith.constant 0 : index
      %68 = vector.load %arg6[%c0_25, %c0_26] : memref<1x1xf32, #tpu.memory_space<vmem>>, vector<1x1xf32>
      tpu.vector_store %arg6[%c0_25, %c0_26], %67 {strides = array<i32>} : memref<1x1xf32, #tpu.memory_space<vmem>>, vector<1x1xf32>,
      %c0_27 = arith.constant 0 : index
      %c0_28 = arith.constant 0 : index
      %69 = vector.load %arg7[%c0_27, %c0_28] : memref<1x1xf32, #tpu.memory_space<vmem>>, vector<1x1xf32>
      %70 = arith.mulf %15, %33 : vector<16x1xf32>
      %cst_29 = arith.constant dense<0.000000e+00> : vector<1xf32>
      %71 = vector.multi_reduction <add>, %70, %cst_29 [0] : vector<16x1xf32> to vector<1xf32>
      %72 = vector.shape_cast %71 : vector<1xf32> to vector<1x1xf32>
      %73 = arith.addf %69, %72 : vector<1x1xf32>
      %c0_30 = arith.constant 0 : index
      %c0_31 = arith.constant 0 : index
      %74 = vector.load %arg7[%c0_30, %c0_31] : memref<1x1xf32, #tpu.memory_space<vmem>>, vector<1x1xf32>
      tpu.vector_store %arg7[%c0_30, %c0_31], %73 {strides = array<i32>} : memref<1x1xf32, #tpu.memory_space<vmem>>, vector<1x1xf32>,
    } else {
    }
    %c16_i32_8 = arith.constant 16 : i32
    %23 = arith.addi %16, %c16_i32_8 : i32
    %c32_i32_9 = arith.constant 32 : i32
    %24 = arith.cmpi sgt, %23, %c32_i32_9 : i32
    %25 = arith.extui %24 : i1 to i32
    %c0_i32_10 = arith.constant 0 : i32
    %26 = arith.cmpi ne, %25, %c0_i32_10 : i32
    scf.if %26 {
      %c32_i32_12 = arith.constant 32 : i32
      %30 = vector.broadcast %c32_i32_12 : i32 to vector<16x1xi32>
      %31 = arith.cmpi sge, %19, %30 : vector<16x1xi32>
      %32 = arith.extui %31 : vector<16x1xi1> to vector<16x1xi32>
      %33 = arith.sitofp %32 : vector<16x1xi32> to vector<16x1xf32>
      %c0_13 = arith.constant 0 : index
      %c0_14 = arith.constant 0 : index
      %34 = vector.load %arg8[%c0_13, %c0_14] : memref<1x1xf32, #tpu.memory_space<vmem>>, vector<1x1xf32>
      %35 = arith.mulf %15, %33 : vector<16x1xf32>
      %cst_15 = arith.constant dense<0.000000e+00> : vector<1xf32>
      %36 = vector.multi_reduction <add>, %35, %cst_15 [0] : vector<16x1xf32> to vector<1xf32>
      %37 = vector.shape_cast %36 : vector<1xf32> to vector<1x1xf32>
      %38 = arith.addf %34, %37 : vector<1x1xf32>
      %c0_16 = arith.constant 0 : index
      %c0_17 = arith.constant 0 : index
      %39 = vector.load %arg8[%c0_16, %c0_17] : memref<1x1xf32, #tpu.memory_space<vmem>>, vector<1x1xf32>
      tpu.vector_store %arg8[%c0_16, %c0_17], %38 {strides = array<i32>} : memref<1x1xf32, #tpu.memory_space<vmem>>, vector<1x1xf32>,
    } else {
    }
    %c3_i32 = arith.constant 3 : i32
    %27 = arith.cmpi eq, %arg0, %c3_i32 : i32
    %28 = arith.extui %27 : i1 to i32
    %c0_i32_11 = arith.constant 0 : i32
    %29 = arith.cmpi ne, %28, %c0_i32_11 : i32
    scf.if %29 {
      %c0_12 = arith.constant 0 : index
      %c0_13 = arith.constant 0 : index
      %30 = vector.load %arg5[%c0_12, %c0_13] : memref<1x128xf32, #tpu.memory_space<vmem>>, vector<1x128xf32>
      %cst_14 = arith.constant 3.125000e-02 : f32
      %31 = vector.broadcast %cst_14 : f32 to vector<1x128xf32>
      %32 = arith.mulf %30, %31 : vector<1x128xf32>
      %33 = arith.mulf %32, %32 : vector<1x128xf32>
      %cst_15 = arith.constant dense<0.000000e+00> : vector<1xf32>
      %34 = vector.multi_reduction <add>, %33, %cst_15 [1] : vector<1x128xf32> to vector<1xf32>
      %35 = vector.shape_cast %34 : vector<1xf32> to vector<1x1xf32>
      %36 = math.sqrt %35 : vector<1x1xf32>
      %c0_16 = arith.constant 0 : index
      %c0_17 = arith.constant 0 : index
      %37 = vector.load %arg6[%c0_16, %c0_17] : memref<1x1xf32, #tpu.memory_space<vmem>>, vector<1x1xf32>
      %cst_18 = arith.constant 3.125000e-02 : f32
      %38 = vector.broadcast %cst_18 : f32 to vector<1x1xf32>
      %39 = arith.mulf %37, %38 : vector<1x1xf32>
      %cst_19 = arith.constant 2.000000e+00 : f32
      %40 = vector.broadcast %cst_19 : f32 to vector<1x1xf32>
      %41 = arith.subf %40, %39 : vector<1x1xf32>
      %c0_20 = arith.constant 0 : index
      %c0_21 = arith.constant 0 : index
      %42 = vector.load %arg7[%c0_20, %c0_21] : memref<1x1xf32, #tpu.memory_space<vmem>>, vector<1x1xf32>
      %cst_22 = arith.constant 3.125000e-02 : f32
      %43 = vector.broadcast %cst_22 : f32 to vector<1x1xf32>
      %44 = arith.mulf %42, %43 : vector<1x1xf32>
      %cst_23 = arith.constant 2.000000e+00 : f32
      %45 = vector.broadcast %cst_23 : f32 to vector<1x1xf32>
      %46 = arith.subf %45, %44 : vector<1x1xf32>
      %c0_24 = arith.constant 0 : index
      %c0_25 = arith.constant 0 : index
      %47 = vector.load %arg8[%c0_24, %c0_25] : memref<1x1xf32, #tpu.memory_space<vmem>>, vector<1x1xf32>
      %cst_26 = arith.constant 3.125000e-02 : f32
      %48 = vector.broadcast %cst_26 : f32 to vector<1x1xf32>
      %49 = arith.mulf %47, %48 : vector<1x1xf32>
      %50 = arith.addf %46, %49 : vector<1x1xf32>
      %cst_27 = arith.constant 5.000000e-01 : f32
      %51 = vector.broadcast %cst_27 : f32 to vector<1x1xf32>
      %52 = arith.mulf %51, %36 : vector<1x1xf32>
      %53 = tpu.iota {dimensions = array<i32: 0>} : vector<8x128xi32>
      %c0_i32_28 = arith.constant 0 : i32
      %54 = vector.broadcast %c0_i32_28 : i32 to vector<8x128xi32>
      %55 = arith.cmpi eq, %53, %54 : vector<8x128xi32>
      %c1_i32 = arith.constant 1 : i32
      %56 = vector.broadcast %c1_i32 : i32 to vector<8x128xi32>
      %57 = arith.cmpi eq, %53, %56 : vector<8x128xi32>
      %c2_i32 = arith.constant 2 : i32
      %58 = vector.broadcast %c2_i32 : i32 to vector<8x128xi32>
      %59 = arith.cmpi eq, %53, %58 : vector<8x128xi32>
      %cst_29 = arith.constant 0.000000e+00 : f32
      %60 = vector.shape_cast %52 : vector<1x1xf32> to vector<1x1xf32>
      %61 = vector.broadcast %60 : vector<1x1xf32> to vector<8x128xf32>
      %62 = vector.broadcast %cst_29 : f32 to vector<8x128xf32>
      %63 = arith.select %59, %61, %62 : vector<8x128xi1>, vector<8x128xf32>
      %64 = vector.shape_cast %50 : vector<1x1xf32> to vector<1x1xf32>
      %65 = vector.broadcast %64 : vector<1x1xf32> to vector<8x128xf32>
      %66 = arith.select %57, %65, %63 : vector<8x128xi1>, vector<8x128xf32>
      %67 = vector.shape_cast %41 : vector<1x1xf32> to vector<1x1xf32>
      %68 = vector.broadcast %67 : vector<1x1xf32> to vector<8x128xf32>
      %69 = arith.select %55, %68, %66 : vector<8x128xi1>, vector<8x128xf32>
      %c0_30 = arith.constant 0 : index
      %c0_31 = arith.constant 0 : index
      %70 = vector.load %arg3[%c0_30, %c0_31] : memref<8x128xf32, #tpu.memory_space<vmem>>, vector<8x128xf32>
      tpu.vector_store %arg3[%c0_30, %c0_31], %69 {strides = array<i32>} : memref<8x128xf32, #tpu.memory_space<vmem>>, vector<8x128xf32>,
    } else {
    }
    return
  }
  func.func @transform_0(%arg0: i32) -> (i32, i32) {
    %c0_i32 = arith.constant 0 : i32
    %c0_i32_0 = arith.constant 0 : i32
    return %arg0, %c0_i32 : i32, i32
  }
  func.func @transform_1(%arg0: i32) -> (i32, i32) {
    %c0_i32 = arith.constant 0 : i32
    %c0_i32_0 = arith.constant 0 : i32
    %c0_i32_1 = arith.constant 0 : i32
    return %c0_i32, %c0_i32_0 : i32, i32
  }
  func.func @transform_2(%arg0: i32) -> (i32, i32) {
    %c0_i32 = arith.constant 0 : i32
    %c0_i32_0 = arith.constant 0 : i32
    %c0_i32_1 = arith.constant 0 : i32
    return %c0_i32, %c0_i32_0 : i32, i32
  }
}

</mosaic_0001>

<llo_original>
// kernel: tpu_custom_call.1
$region0: #{tpu_custom_call.1}
  #allocation0 [shape = 'u32[]', space=smem, size = 0x4, offset = 0x4, fixed_abs, tag = 'smem constant byte address 0x4 - core index']
  #allocation1 [shape = 'u32[144,128]{1,0:T(1,128)}', space=vmem, size = 0x12000, scoped, tag = 'internal scratch']
  #allocation2 [shape = 'f32[128,256]{1,0:T(8,128)}', space=vmem, size = 0x20000, scoped, tag = 'scratch operand']
  #allocation3 [shape = 'f32[1,128]{1,0:T(1,128)}', space=vmem, size = 0x200, scoped, tag = 'scratch operand']
  #allocation4 [shape = 'f32[1,1]{1,0:T(1,128)}', space=vmem, size = 0x200, scoped, tag = 'scratch operand']
  #allocation5 [shape = 'f32[1,1]{1,0:T(1,128)}', space=vmem, size = 0x200, scoped, tag = 'scratch operand']
  #allocation6 [shape = 'f32[1,1]{1,0:T(1,128)}', space=vmem, size = 0x200, scoped, tag = 'scratch operand']
  %s0 = inlined_call_operand.hbm [shape: f32[64,256], index: 0, kind: input, shape index: {}]
  %s1 = inlined_call_operand.hbm [shape: f32[128,256], index: 1, kind: input, shape index: {}]
  %s2 = inlined_call_operand.hbm [shape: f32[8,128], index: 2, kind: output, shape index: {}]
  %s3 = sld [smem:[#allocation0]]
  $region65: #{tpu_custom_call.1} parent=0
    _
  %s5 = ssub.s32 1, %s3
  %s6 = scalar_select 0, %s5, %s3
  $region1: #{tpu_custom_call.1} parent=0
    #allocation7 [shape = 'u8[32768]{0}', space=vmem, size = 0x8000, scoped, tag = 'input window, operand 0']
    #allocation8 [shape = 's32[2]{0}', space=sflag, size = 0x8, scoped, tag = 'scoped memory for tpu_custom_call.1']
    #allocation9 [shape = 's32[2]{0}', space=sflag, size = 0x8, scoped, tag = 'scoped memory for tpu_custom_call.1']
    #allocation10 [shape = 'u8[131072]{0}', space=vmem, size = 0x20000, scoped, tag = 'input window, operand 1, single buffered']
    #allocation11 [shape = 's32[1]{0}', space=sflag, size = 0x4, scoped, tag = 'scoped memory for tpu_custom_call.1']
    #allocation12 [shape = 'u8[4096]{0}', space=vmem, size = 0x1000, scoped, tag = 'output window, operand 0, single buffered']
    %7 = vsyncpa [#allocation8], 0
    %s8 = scalar_lea.sflag [#allocation8], 1
    %9 = vsyncpa %s8, 0
    %10 = vsyncpa [#allocation11], 0
    %11 = vsyncpa [#allocation9], 0
    loop: start=0, step=1, limit=6
    $region2: #{tpu_custom_call.1} parent=1 // loop_pre_header
      _
    $region3: #{tpu_custom_call.1} parent=1 // loop_header
      %s13 = sphi 0, %s17
      %p14 = scmp.ge.s32.totalorder %s13, 6
      %s23 = sphi 0, %s25
      %s26 = sphi 0, %s23
      %s27 = sphi 0, %s26
      %s43 = sphi 0, %s27
      %s47 = sphi 0, %s47
      %s49 = sphi 0, %s47
      %s50 = sphi 0, %s49
      %s64 = sphi 0, %s50
      %s68 = sphi 0, %s68
      %s70 = sphi 0, %s68
      %s71 = sphi 0, %s70
      %s85 = sphi 0, %s71
    $region4: #{tpu_custom_call.1} parent=1 // loop_header_branch
      %16 = sbr.rel (%p14) target = $region8
    $region5: #{tpu_custom_call.1} parent=1 // loop_body
      %s18 = ssub.s32 %s13, 1
      %s19 = ssub.s32 %s13, 2
      %s20 = sadd.s32 %s13, 1
      %s21 = ssub.s32 %s13, %s20
      %p22 = scmp.eq.s32.totalorder %s21, 0
      %s24 = sadd.s32 %s23, 1
      %s25 = scalar_select %p22, %s23, %s24
      %p28 = pneg %p22
      %p29 = scmp.eq.s32.totalorder %s13, 3
      %p30 = por %p28, %p29
      %p31 = scmp.ne.s32.totalorder %s23, %s26
      %p32 = scmp.eq.s32.totalorder %s13, 0
      %p33 = por %p31, %p32
      %p34 = scmp.ne.s32.totalorder %s23, %s26
      %p35 = scmp.eq.s32.totalorder %s18, 3
      %p36 = por %p34, %p35
      %p37 = scmp.ne.s32.totalorder %s26, %s27
      %p38 = scmp.eq.s32.totalorder %s18, 0
      %p39 = por %p37, %p38
      %p40 = scmp.ne.s32.totalorder %s26, %s27
      %p41 = scmp.eq.s32.totalorder %s19, 3
      %p42 = por %p40, %p41
      %p44 = scmp.ne.s32.totalorder %s27, %s43
      %p45 = scmp.eq.s32.totalorder %s19, 0
      %p46 = por %p44, %p45
      %s48 = sadd.s32 %s47, 1
      %p51 = scmp.eq.s32.totalorder %s13, 3
      %p52 = scmp.ne.s32.totalorder %s47, %s49
      %p53 = scmp.eq.s32.totalorder %s13, 0
      %p54 = por %p52, %p53
      %p55 = scmp.ne.s32.totalorder %s47, %s49
      %p56 = scmp.eq.s32.totalorder %s18, 3
      %p57 = por %p55, %p56
      %p58 = scmp.ne.s32.totalorder %s49, %s50
      %p59 = scmp.eq.s32.totalorder %s18, 0
      %p60 = por %p58, %p59
      %p61 = scmp.ne.s32.totalorder %s49, %s50
      %p62 = scmp.eq.s32.totalorder %s19, 3
      %p63 = por %p61, %p62
      %p65 = scmp.ne.s32.totalorder %s50, %s64
      %p66 = scmp.eq.s32.totalorder %s19, 0
      %p67 = por %p65, %p66
      %s69 = sadd.s32 %s68, 1
      %p72 = scmp.eq.s32.totalorder %s13, 3
      %p73 = scmp.ne.s32.totalorder %s68, %s70
      %p74 = scmp.eq.s32.totalorder %s13, 0
      %p75 = por %p73, %p74
      %p76 = scmp.ne.s32.totalorder %s68, %s70
      %p77 = scmp.eq.s32.totalorder %s18, 3
      %p78 = por %p76, %p77
      %p79 = scmp.ne.s32.totalorder %s70, %s71
      %p80 = scmp.eq.s32.totalorder %s18, 0
      %p81 = por %p79, %p80
      %p82 = scmp.ne.s32.totalorder %s70, %s71
      %p83 = scmp.eq.s32.totalorder %s19, 3
      %p84 = por %p82, %p83
      %p86 = scmp.ne.s32.totalorder %s71, %s85
      %p87 = scmp.eq.s32.totalorder %s19, 0
      %p88 = por %p86, %p87
      %p89 = scmp.le.s32.totalorder 1, %s13
      %p90 = scmp.lt.s32.totalorder %s13, 5
      %p91 = pnand %p89, %p90
      %p92 = pneg %p91
      // Predicated region
      $region9: #{tpu_custom_call.1} parent=5 // pred_check
        _
      $region10: #{tpu_custom_call.1} parent=5 // pred_check_branch
        %94 = sbr.rel (%p91) target = $region12
      $region11: #{tpu_custom_call.1} parent=5 // pred_region
        %s95 = ssub.s32 %s13, 1
        // Predicated region
        $region13: #{tpu_custom_call.1} parent=11 // pred_check
          %p96 = pneg %p60
        $region14: #{tpu_custom_call.1} parent=11 // pred_check_branch
          %98 = sbr.rel (%p96) target = $region16
        $region15: #{tpu_custom_call.1} parent=11 // pred_region
          %s100 = ssub.s32 4096, 4096
          %101 = vsyncadd [#allocation11], %s100
          %s102 = sshll.u32 [#allocation10], 4
          %s103 = int_to_ptr.vmem [resolvable:$true] %s102
          %108 = dma.hbm_to_vmem [thread:$0]  %s1, 4096, %s103, [#allocation11], 256, 256, 16
        $region16: #{tpu_custom_call.1} parent=11 // pred_fallthru
          _
      $region12: #{tpu_custom_call.1} parent=5 // pred_fallthru
        _
      %p109 = scmp.lt.s32.totalorder %s13, 4
      // Predicated region
      $region17: #{tpu_custom_call.1} parent=5 // pred_check
        %p110 = pneg %p109
      $region18: #{tpu_custom_call.1} parent=5 // pred_check_branch
        %112 = sbr.rel (%p110) target = $region20
      $region19: #{tpu_custom_call.1} parent=5 // pred_region
        // Predicated region
        $region21: #{tpu_custom_call.1} parent=19 // pred_check
          %p113 = pneg %p33
        $region22: #{tpu_custom_call.1} parent=19 // pred_check_branch
          %115 = sbr.rel (%p113) target = $region24
        $region23: #{tpu_custom_call.1} parent=19 // pred_region
          %s116 = sand.u32 %s23, 1
          %s117 = scalar_lea.sflag [#allocation8], %s116
          %s118 = sand.u32 %s23, 1
          %s119 = smul.addr %s118, 32
          %s120 = scalar_lea.vmem [#allocation7], %s119
          %s121 = smul.u32 2, %s13
          %s123 = ssub.s32 512, 512
          %124 = vsyncadd %s117, %s123
          %s125 = smul.addr %s121, 2
          %s126 = smul.addr %s125, 128
          %s127 = scalar_lea.hbm %s0, %s126
          %s128 = sshll.u32 %s120, 4
          %s129 = int_to_ptr.vmem [resolvable:$true] %s128
          %134 = dma.hbm_to_vmem [thread:$0]  %s127, 512, %s129, %s117, 256, 256, 16
        $region24: #{tpu_custom_call.1} parent=19 // pred_fallthru
          _
      $region20: #{tpu_custom_call.1} parent=5 // pred_fallthru
        _
      %p135 = scmp.le.s32.totalorder 1, %s13
      %p136 = scmp.lt.s32.totalorder %s13, 5
      %p137 = pnand %p135, %p136
      %p138 = pneg %p137
      // Predicated region
      $region25: #{tpu_custom_call.1} parent=5 // pred_check
        _
      $region26: #{tpu_custom_call.1} parent=5 // pred_check_branch
        %140 = sbr.rel (%p137) target = $region28
      $region27: #{tpu_custom_call.1} parent=5 // pred_region
        %s141 = ssub.s32 %s13, 1
        %s142 = sand.u32 %s26, 1
        %s143 = scalar_lea.sflag [#allocation8], %s142
        %s144 = sand.u32 %s26, 1
        %s145 = smul.addr %s144, 32
        %s146 = scalar_lea.vmem [#allocation7], %s145
        // Predicated region
        $region29: #{tpu_custom_call.1} parent=27 // pred_check
          %p147 = pneg %p39
        $region30: #{tpu_custom_call.1} parent=27 // pred_check_branch
          %149 = sbr.rel (%p147) target = $region32
        $region31: #{tpu_custom_call.1} parent=27 // pred_region
          %150 = dma.done %s143, 512
        $region32: #{tpu_custom_call.1} parent=27 // pred_fallthru
          _
        // Predicated region
        $region33: #{tpu_custom_call.1} parent=27 // pred_check
          %p151 = pneg %p60
        $region34: #{tpu_custom_call.1} parent=27 // pred_check_branch
          %153 = sbr.rel (%p151) target = $region36
        $region35: #{tpu_custom_call.1} parent=27 // pred_region
          %154 = dma.done [#allocation11], 4096
        $region36: #{tpu_custom_call.1} parent=27 // pred_fallthru
          _
        %s155 = sand.u32 %s26, 1
        %s156 = scalar_lea.sflag [#allocation8], %s155
        %s157 = sand.u32 %s26, 1
        %s158 = smul.addr %s157, 32
        %s159 = scalar_lea.vmem [#allocation7], %s158
        %p160 = pneg %p39
        %p161 = pneg %p36
        %p162 = pneg %p60
        %p163 = pneg %p57
        %p164 = pneg %p81
        %p165 = pneg %p78
        %s166 = smul.u32 2, %s18
        %p167 = scmp.eq.s32.totalorder %s18, 0
        // Predicated region
        $region37: #{tpu_custom_call.1} parent=27 // pred_check
          %p168 = pneg %p167
        $region38: #{tpu_custom_call.1} parent=27 // pred_check_branch
          %170 = sbr.rel (%p168) target = $region40
        $region39: #{tpu_custom_call.1} parent=27 // pred_region
          %v171 = vld [vmem:[#allocation10] sm:$0xff]
          %v172 = vld [vmem:[#allocation10 + $0x8] sm:$0xff]
          %v173 = vld [vmem:[#allocation10 + $0x10] sm:$0xff]
          %v174 = vld [vmem:[#allocation10 + $0x18] sm:$0xff]
          %v175 = vld [vmem:[#allocation10 + $0x20] sm:$0xff]
          %v176 = vld [vmem:[#allocation10 + $0x28] sm:$0xff]
          %v177 = vld [vmem:[#allocation10 + $0x30] sm:$0xff]
          %v178 = vld [vmem:[#allocation10 + $0x38] sm:$0xff]
          %v179 = vld [vmem:[#allocation10 + $0x40] sm:$0xff]
          %v180 = vld [vmem:[#allocation10 + $0x48] sm:$0xff]
          %v181 = vld [vmem:[#allocation10 + $0x50] sm:$0xff]
          %v182 = vld [vmem:[#allocation10 + $0x58] sm:$0xff]
          %v183 = vld [vmem:[#allocation10 + $0x60] sm:$0xff]
          %v184 = vld [vmem:[#allocation10 + $0x68] sm:$0xff]
          %v185 = vld [vmem:[#allocation10 + $0x70] sm:$0xff]
          %v186 = vld [vmem:[#allocation10 + $0x78] sm:$0xff]
          %v187 = vld [vmem:[#allocation10 + $0x80] sm:$0xff]
          %v188 = vld [vmem:[#allocation10 + $0x88] sm:$0xff]
          %v189 = vld [vmem:[#allocation10 + $0x90] sm:$0xff]
          %v190 = vld [vmem:[#allocation10 + $0x98] sm:$0xff]
          %v191 = vld [vmem:[#allocation10 + $0xa0] sm:$0xff]
          %v192 = vld [vmem:[#allocation10 + $0xa8] sm:$0xff]
          %v193 = vld [vmem:[#allocation10 + $0xb0] sm:$0xff]
          %v194 = vld [vmem:[#allocation10 + $0xb8] sm:$0xff]
          %v195 = vld [vmem:[#allocation10 + $0xc0] sm:$0xff]
          %v196 = vld [vmem:[#allocation10 + $0xc8] sm:$0xff]
          %v197 = vld [vmem:[#allocation10 + $0xd0] sm:$0xff]
          %v198 = vld [vmem:[#allocation10 + $0xd8] sm:$0xff]
          %v199 = vld [vmem:[#allocation10 + $0xe0] sm:$0xff]
          %v200 = vld [vmem:[#allocation10 + $0xe8] sm:$0xff]
          %v201 = vld [vmem:[#allocation10 + $0xf0] sm:$0xff]
          %v202 = vld [vmem:[#allocation10 + $0xf8] sm:$0xff]
          %v203 = vmul.f32 %v171, %v171
          %v204 = vmul.f32 %v172, %v172
          %v205 = vmul.f32 %v173, %v173
          %v206 = vmul.f32 %v174, %v174
          %v207 = vmul.f32 %v175, %v175
          %v208 = vmul.f32 %v176, %v176
          %v209 = vmul.f32 %v177, %v177
          %v210 = vmul.f32 %v178, %v178
          %v211 = vmul.f32 %v179, %v179
          %v212 = vmul.f32 %v180, %v180
          %v213 = vmul.f32 %v181, %v181
          %v214 = vmul.f32 %v182, %v182
          %v215 = vmul.f32 %v183, %v183
          %v216 = vmul.f32 %v184, %v184
          %v217 = vmul.f32 %v185, %v185
          %v218 = vmul.f32 %v186, %v186
          %v219 = vmul.f32 %v187, %v187
          %v220 = vmul.f32 %v188, %v188
          %v221 = vmul.f32 %v189, %v189
          %v222 = vmul.f32 %v190, %v190
          %v223 = vmul.f32 %v191, %v191
          %v224 = vmul.f32 %v192, %v192
          %v225 = vmul.f32 %v193, %v193
          %v226 = vmul.f32 %v194, %v194
          %v227 = vmul.f32 %v195, %v195
          %v228 = vmul.f32 %v196, %v196
          %v229 = vmul.f32 %v197, %v197
          %v230 = vmul.f32 %v198, %v198
          %v231 = vmul.f32 %v199, %v199
          %v232 = vmul.f32 %v200, %v200
          %v233 = vmul.f32 %v201, %v201
          %v234 = vmul.f32 %v202, %v202
          %v235 = vadd.f32 %v203, %v204
          %236 = vadd.xlane.f32.xlu0 %v235
          %v237 = vpop.xlane.xlu0 %236
          %v238 = vadd.f32 %v205, %v206
          %239 = vadd.xlane.f32.xlu0 %v238
          %v240 = vpop.xlane.xlu0 %239
          %v241 = vadd.f32 %v207, %v208
          %242 = vadd.xlane.f32.xlu0 %v241
          %v243 = vpop.xlane.xlu0 %242
          %v244 = vadd.f32 %v209, %v210
          %245 = vadd.xlane.f32.xlu0 %v244
          %v246 = vpop.xlane.xlu0 %245
          %v247 = vadd.f32 %v211, %v212
          %248 = vadd.xlane.f32.xlu0 %v247
          %v249 = vpop.xlane.xlu0 %248
          %v250 = vadd.f32 %v213, %v214
          %251 = vadd.xlane.f32.xlu0 %v250
          %v252 = vpop.xlane.xlu0 %251
          %v253 = vadd.f32 %v215, %v216
          %254 = vadd.xlane.f32.xlu0 %v253
          %v255 = vpop.xlane.xlu0 %254
          %v256 = vadd.f32 %v217, %v218
          %257 = vadd.xlane.f32.xlu0 %v256
          %v258 = vpop.xlane.xlu0 %257
          %v259 = vadd.f32 %v219, %v220
          %260 = vadd.xlane.f32.xlu0 %v259
          %v261 = vpop.xlane.xlu0 %260
          %v262 = vadd.f32 %v221, %v222
          %263 = vadd.xlane.f32.xlu0 %v262
          %v264 = vpop.xlane.xlu0 %263
          %v265 = vadd.f32 %v223, %v224
          %266 = vadd.xlane.f32.xlu0 %v265
          %v267 = vpop.xlane.xlu0 %266
          %v268 = vadd.f32 %v225, %v226
          %269 = vadd.xlane.f32.xlu0 %v268
          %v270 = vpop.xlane.xlu0 %269
          %v271 = vadd.f32 %v227, %v228
          %272 = vadd.xlane.f32.xlu0 %v271
          %v273 = vpop.xlane.xlu0 %272
          %v274 = vadd.f32 %v229, %v230
          %275 = vadd.xlane.f32.xlu0 %v274
          %v276 = vpop.xlane.xlu0 %275
          %v277 = vadd.f32 %v231, %v232
          %278 = vadd.xlane.f32.xlu0 %v277
          %v279 = vpop.xlane.xlu0 %278
          %v280 = vadd.f32 %v233, %v234
          %281 = vadd.xlane.f32.xlu0 %v280
          %v282 = vpop.xlane.xlu0 %281
          %v283 = vmax.f32 %v237, 1e-24
          %v284 = vmax.f32 %v240, 1e-24
          %v285 = vmax.f32 %v243, 1e-24
          %v286 = vmax.f32 %v246, 1e-24
          %v287 = vmax.f32 %v249, 1e-24
          %v288 = vmax.f32 %v252, 1e-24
          %v289 = vmax.f32 %v255, 1e-24
          %v290 = vmax.f32 %v258, 1e-24
          %v291 = vmax.f32 %v261, 1e-24
          %v292 = vmax.f32 %v264, 1e-24
          %v293 = vmax.f32 %v267, 1e-24
          %v294 = vmax.f32 %v270, 1e-24
          %v295 = vmax.f32 %v273, 1e-24
          %v296 = vmax.f32 %v276, 1e-24
          %v297 = vmax.f32 %v279, 1e-24
          %v298 = vmax.f32 %v282, 1e-24
          %v299 = vrsqrt.pop %v283
          %v300 = vrsqrt.pop %v284
          %v301 = vrsqrt.pop %v285
          %v302 = vrsqrt.pop %v286
          %v303 = vrsqrt.pop %v287
          %v304 = vrsqrt.pop %v288
          %v305 = vrsqrt.pop %v289
          %v306 = vrsqrt.pop %v290
          %v307 = vrsqrt.pop %v291
          %v308 = vrsqrt.pop %v292
          %v309 = vrsqrt.pop %v293
          %v310 = vrsqrt.pop %v294
          %v311 = vrsqrt.pop %v295
          %v312 = vrsqrt.pop %v296
          %v313 = vrsqrt.pop %v297
          %v314 = vrsqrt.pop %v298
          %v315 = vmul.f32 %v171, %v299
          %v316 = vmul.f32 %v172, %v299
          %v317 = vmul.f32 %v173, %v300
          %v318 = vmul.f32 %v174, %v300
          %v319 = vmul.f32 %v175, %v301
          %v320 = vmul.f32 %v176, %v301
          %v321 = vmul.f32 %v177, %v302
          %v322 = vmul.f32 %v178, %v302
          %v323 = vmul.f32 %v179, %v303
          %v324 = vmul.f32 %v180, %v303
          %v325 = vmul.f32 %v181, %v304
          %v326 = vmul.f32 %v182, %v304
          %v327 = vmul.f32 %v183, %v305
          %v328 = vmul.f32 %v184, %v305
          %v329 = vmul.f32 %v185, %v306
          %v330 = vmul.f32 %v186, %v306
          %v331 = vmul.f32 %v187, %v307
          %v332 = vmul.f32 %v188, %v307
          %v333 = vmul.f32 %v189, %v308
          %v334 = vmul.f32 %v190, %v308
          %v335 = vmul.f32 %v191, %v309
          %v336 = vmul.f32 %v192, %v309
          %v337 = vmul.f32 %v193, %v310
          %v338 = vmul.f32 %v194, %v310
          %v339 = vmul.f32 %v195, %v311
          %v340 = vmul.f32 %v196, %v311
          %v341 = vmul.f32 %v197, %v312
          %v342 = vmul.f32 %v198, %v312
          %v343 = vmul.f32 %v199, %v313
          %v344 = vmul.f32 %v200, %v313
          %v345 = vmul.f32 %v201, %v314
          %v346 = vmul.f32 %v202, %v314
          %347 = vst [vmem:[#allocation2] sm:$0xff] %v315
          %348 = vst [vmem:[#allocation2 + $0x8] sm:$0xff] %v316
          %349 = vst [vmem:[#allocation2 + $0x10] sm:$0xff] %v317
          %350 = vst [vmem:[#allocation2 + $0x18] sm:$0xff] %v318
          %351 = vst [vmem:[#allocation2 + $0x20] sm:$0xff] %v319
          %352 = vst [vmem:[#allocation2 + $0x28] sm:$0xff] %v320
          %353 = vst [vmem:[#allocation2 + $0x30] sm:$0xff] %v321
          %354 = vst [vmem:[#allocation2 + $0x38] sm:$0xff] %v322
          %355 = vst [vmem:[#allocation2 + $0x40] sm:$0xff] %v323
          %356 = vst [vmem:[#allocation2 + $0x48] sm:$0xff] %v324
          %357 = vst [vmem:[#allocation2 + $0x50] sm:$0xff] %v325
          %358 = vst [vmem:[#allocation2 + $0x58] sm:$0xff] %v326
          %359 = vst [vmem:[#allocation2 + $0x60] sm:$0xff] %v327
          %360 = vst [vmem:[#allocation2 + $0x68] sm:$0xff] %v328
          %361 = vst [vmem:[#allocation2 + $0x70] sm:$0xff] %v329
          %362 = vst [vmem:[#allocation2 + $0x78] sm:$0xff] %v330
          %363 = vst [vmem:[#allocation2 + $0x80] sm:$0xff] %v331
          %364 = vst [vmem:[#allocation2 + $0x88] sm:$0xff] %v332
          %365 = vst [vmem:[#allocation2 + $0x90] sm:$0xff] %v333
          %366 = vst [vmem:[#allocation2 + $0x98] sm:$0xff] %v334
          %367 = vst [vmem:[#allocation2 + $0xa0] sm:$0xff] %v335
          %368 = vst [vmem:[#allocation2 + $0xa8] sm:$0xff] %v336
          %369 = vst [vmem:[#allocation2 + $0xb0] sm:$0xff] %v337
          %370 = vst [vmem:[#allocation2 + $0xb8] sm:$0xff] %v338
          %371 = vst [vmem:[#allocation2 + $0xc0] sm:$0xff] %v339
          %372 = vst [vmem:[#allocation2 + $0xc8] sm:$0xff] %v340
          %373 = vst [vmem:[#allocation2 + $0xd0] sm:$0xff] %v341
          %374 = vst [vmem:[#allocation2 + $0xd8] sm:$0xff] %v342
          %375 = vst [vmem:[#allocation2 + $0xe0] sm:$0xff] %v343
          %376 = vst [vmem:[#allocation2 + $0xe8] sm:$0xff] %v344
          %377 = vst [vmem:[#allocation2 + $0xf0] sm:$0xff] %v345
          %378 = vst [vmem:[#allocation2 + $0xf8] sm:$0xff] %v346
          %379 = vst [vmem:[#allocation3] sm:$0x1] 0.0
          %vm380 = vcmask 0
          %381 = vst.msk [vmem:[#allocation4] sm:$0x1] %vm380, 0.0
          %382 = vst.msk [vmem:[#allocation5] sm:$0x1] %vm380, 0.0
          %383 = vst.msk [vmem:[#allocation6] sm:$0x1] %vm380, 0.0
        $region40: #{tpu_custom_call.1} parent=27 // pred_fallthru
          _
        %v384 = vld [vmem:[%s146] sm:$0xff]
        %v385 = vld [vmem:[%s146 + $0x8] sm:$0xff]
        %v386 = vld [vmem:[%s146 + $0x10] sm:$0xff]
        %v387 = vld [vmem:[%s146 + $0x18] sm:$0xff]
        %v388 = vmul.f32 %v384, %v384
        %v389 = vmul.f32 %v385, %v385
        %v390 = vmul.f32 %v386, %v386
        %v391 = vmul.f32 %v387, %v387
        %v392 = vadd.f32 %v388, %v389
        %393 = vadd.xlane.f32.xlu0 %v392
        %v394 = vpop.xlane.xlu0 %393
        %v395 = vadd.f32 %v390, %v391
        %396 = vadd.xlane.f32.xlu0 %v395
        %v397 = vpop.xlane.xlu0 %396
        %v398 = vmax.f32 %v394, 1e-24
        %v399 = vmax.f32 %v397, 1e-24
        %v400 = vrsqrt.pop %v398
        %v401 = vrsqrt.pop %v399
        %v402 = vmul.f32 %v384, %v400
        %v403 = vmul.f32 %v385, %v400
        %v404 = vmul.f32 %v386, %v401
        %v405 = vmul.f32 %v387, %v401
        %v406 = vld [vmem:[#allocation2] sm:$0xff]
        %v407 = vld [vmem:[#allocation2 + $0x8] sm:$0xff]
        %v408 = vld [vmem:[#allocation2 + $0x10] sm:$0xff]
        %v409 = vld [vmem:[#allocation2 + $0x18] sm:$0xff]
        %v410 = vld [vmem:[#allocation2 + $0x20] sm:$0xff]
        %v411 = vld [vmem:[#allocation2 + $0x28] sm:$0xff]
        %v412 = vld [vmem:[#allocation2 + $0x30] sm:$0xff]
        %v413 = vld [vmem:[#allocation2 + $0x38] sm:$0xff]
        %v414 = vld [vmem:[#allocation2 + $0x40] sm:$0xff]
        %v415 = vld [vmem:[#allocation2 + $0x48] sm:$0xff]
        %v416 = vld [vmem:[#allocation2 + $0x50] sm:$0xff]
        %v417 = vld [vmem:[#allocation2 + $0x58] sm:$0xff]
        %v418 = vld [vmem:[#allocation2 + $0x60] sm:$0xff]
        %v419 = vld [vmem:[#allocation2 + $0x68] sm:$0xff]
        %v420 = vld [vmem:[#allocation2 + $0x70] sm:$0xff]
        %v421 = vld [vmem:[#allocation2 + $0x78] sm:$0xff]
        %v422 = vld [vmem:[#allocation2 + $0x80] sm:$0xff]
        %v423 = vld [vmem:[#allocation2 + $0x88] sm:$0xff]
        %v424 = vld [vmem:[#allocation2 + $0x90] sm:$0xff]
        %v425 = vld [vmem:[#allocation2 + $0x98] sm:$0xff]
        %v426 = vld [vmem:[#allocation2 + $0xa0] sm:$0xff]
        %v427 = vld [vmem:[#allocation2 + $0xa8] sm:$0xff]
        %v428 = vld [vmem:[#allocation2 + $0xb0] sm:$0xff]
        %v429 = vld [vmem:[#allocation2 + $0xb8] sm:$0xff]
        %v430 = vld [vmem:[#allocation2 + $0xc0] sm:$0xff]
        %v431 = vld [vmem:[#allocation2 + $0xc8] sm:$0xff]
        %v432 = vld [vmem:[#allocation2 + $0xd0] sm:$0xff]
        %v433 = vld [vmem:[#allocation2 + $0xd8] sm:$0xff]
        %v434 = vld [vmem:[#allocation2 + $0xe0] sm:$0xff]
        %v435 = vld [vmem:[#allocation2 + $0xe8] sm:$0xff]
        %v436 = vld [vmem:[#allocation2 + $0xf0] sm:$0xff]
        %v437 = vld [vmem:[#allocation2 + $0xf8] sm:$0xff]
        %438 = vmatprep.subr.mxu0 %v407
        %439 = vmatpush1.xpose.msra.mxu0 %v406
        %440 = vmatprep.subr.mxu0 %v409
        %441 = vmatpush1.xpose.msra.mxu0 %v408
        %442 = vmatprep.subr.mxu0 %v411
        %443 = vmatpush1.xpose.msra.mxu0 %v410
        %444 = vmatprep.subr.mxu0 %v413
        %445 = vmatpush1.xpose.msra.mxu0 %v412
        %446 = vmatprep.subr.mxu0 %v415
        %447 = vmatpush1.xpose.msra.mxu0 %v414
        %448 = vmatprep.subr.mxu0 %v417
        %449 = vmatpush1.xpose.msra.mxu0 %v416
        %450 = vmatprep.subr.mxu0 %v419
        %451 = vmatpush1.xpose.msra.mxu0 %v418
        %452 = vmatprep.subr.mxu0 %v421
        %453 = vmatpush1.xpose.msra.mxu0 %v420
        %454 = vmatprep.subr.mxu0 %v423
        %455 = vmatpush1.xpose.msra.mxu0 %v422
        %456 = vmatprep.subr.mxu0 %v425
        %457 = vmatpush1.xpose.msra.mxu0 %v424
        %458 = vmatprep.subr.mxu0 %v427
        %459 = vmatpush1.xpose.msra.mxu0 %v426
        %460 = vmatprep.subr.mxu0 %v429
        %461 = vmatpush1.xpose.msra.mxu0 %v428
        %462 = vmatprep.subr.mxu0 %v431
        %463 = vmatpush1.xpose.msra.mxu0 %v430
        %464 = vmatprep.subr.mxu0 %v433
        %465 = vmatpush1.xpose.msra.mxu0 %v432
        %466 = vmatprep.subr.mxu0 %v435
        %467 = vmatpush1.xpose.msra.mxu0 %v434
        %468 = vmatprep.subr.mxu0 %v437
        %469 = vmatpush1.xpose.msra.mxu0 %v436
        %470 = vmatprep.subr.mxu0 0.0
        %471 = vmatpush1.xpose.msra.mxu0 0.0
        %472 = vmatprep.subr.mxu0 0.0
        %473 = vmatpush1.xpose.msra.mxu0 0.0
        %474 = vmatprep.subr.mxu0 0.0
        %475 = vmatpush1.xpose.msra.mxu0 0.0
        %476 = vmatprep.subr.mxu0 0.0
        %477 = vmatpush1.xpose.msra.mxu0 0.0
        %478 = vmatprep.subr.mxu0 0.0
        %479 = vmatpush1.xpose.msra.mxu0 0.0
        %480 = vmatprep.subr.mxu0 0.0
        %481 = vmatpush1.xpose.msra.mxu0 0.0
        %482 = vmatprep.subr.mxu0 0.0
        %483 = vmatpush1.xpose.msra.mxu0 0.0
        %484 = vmatprep.subr.mxu0 0.0
        %485 = vmatpush1.xpose.msra.mxu0 0.0
        %486 = vmatprep.subr.mxu0 0.0
        %487 = vmatpush1.xpose.msra.mxu0 0.0
        %488 = vmatprep.subr.mxu0 0.0
        %489 = vmatpush1.xpose.msra.mxu0 0.0
        %490 = vmatprep.subr.mxu0 0.0
        %491 = vmatpush1.xpose.msra.mxu0 0.0
        %492 = vmatprep.subr.mxu0 0.0
        %493 = vmatpush1.xpose.msra.mxu0 0.0
        %494 = vmatprep.subr.mxu0 0.0
        %495 = vmatpush1.xpose.msra.mxu0 0.0
        %496 = vmatprep.subr.mxu0 0.0
        %497 = vmatpush1.xpose.msra.mxu0 0.0
        %498 = vmatprep.subr.mxu0 0.0
        %499 = vmatpush1.xpose.msra.mxu0 0.0
        %500 = vmatprep.subr.mxu0 0.0
        %501 = vmatpush1.xpose.msra.mxu0 0.0
        %502 = vmatprep.mubr.f32.mxu0 %v403
        %503 = vmatmul.mubr.f32.gmra.mrb[0].mxu0 %v402
        %v504 = vpop.f32.mrb[0].mxu0
        %v505 = vadd.f32 0.0, %v504
        %v506 = vpop.f32.mrb[0].mxu0
        %507 = vmatprep.mubr.f32.mxu0 %v405
        %508 = vmatmul.mubr.f32.gmra.mrb[0].mxu0 %v404
        %v509 = vpop.f32.mrb[0].mxu0
        %v510 = vadd.f32 0.0, %v509
        %v511 = vpop.f32.mrb[0].mxu0
        %512 = vdwg.mxu0
        %513 = vmax.xlane.f32.xlu0 %v505
        %v514 = vpop.xlane.xlu0 %513
        %515 = vmax.xlane.f32.xlu0 %v510
        %v516 = vpop.xlane.xlu0 %515
        %s517 = smul.u32 %s18, 16
        %v518 = vlaneseq
        %v519 = vshrl.u32 %v518, 7
        %v520 = vadd.s32 %v519, 8
        %v521 = vstv %s517
        %v522 = vadd.s32 %v521, %v519
        %v523 = vadd.s32 %v521, %v520
        %p524 = scmp.lt.s32.totalorder %s517, 32
        // Predicated region
        $region41: #{tpu_custom_call.1} parent=27 // pred_check
          %p525 = pneg %p524
        $region42: #{tpu_custom_call.1} parent=27 // pred_check_branch
          %527 = sbr.rel (%p525) target = $region44
        $region43: #{tpu_custom_call.1} parent=27 // pred_region
          %vm528 = vcmp.lt.s32.totalorder %v522, 32
          %vm529 = vcmp.lt.s32.totalorder %v523, 32
          %v530 = vsel %vm528, 1, 0
          %v531 = vsel %vm529, 1, 0
          %v532 = vcvt.s32.f32 %v530
          %v533 = vcvt.s32.f32 %v531
          %v534 = vlaneseq
          %v535 = vand.u32 %v534, 127
          %vm536 = vcmp.eq.f32.partialorder %v505, %v514
          %vm537 = vcmp.eq.f32.partialorder %v510, %v516
          %v538 = vsel %vm536, %v535, 128
          %v539 = vsel %vm537, %v535, 128
          %v540 = vand.u32 %v538, 65535
          %v541 = vshra.s32 %v538, 16
          %v542 = vcvt.s32.f32 %v540
          %v543 = vcvt.s32.f32 %v541
          %544 = vmin.xlane.f32.xlu0 %v543
          %v545 = vpop.xlane.xlu0 %544
          %vm546 = vcmp.eq.f32.partialorder %v543, %v545
          %v547 = vsel %vm546, %v542, inf
          %548 = vmin.xlane.f32.xlu0 %v547
          %v549 = vpop.xlane.xlu0 %548
          %v550 = vcvt.f32.s32 %v549
          %v551 = vcvt.f32.s32 %v545
          %v552 = vshll.u32 %v551, 16
          %v553 = vadd.s32 %v552, %v550
          %v554 = vand.u32 %v539, 65535
          %v555 = vshra.s32 %v539, 16
          %v556 = vcvt.s32.f32 %v554
          %v557 = vcvt.s32.f32 %v555
          %558 = vmin.xlane.f32.xlu0 %v557
          %v559 = vpop.xlane.xlu0 %558
          %vm560 = vcmp.eq.f32.partialorder %v557, %v559
          %v561 = vsel %vm560, %v556, inf
          %562 = vmin.xlane.f32.xlu0 %v561
          %v563 = vpop.xlane.xlu0 %562
          %v564 = vcvt.f32.s32 %v563
          %v565 = vcvt.f32.s32 %v559
          %v566 = vshll.u32 %v565, 16
          %v567 = vadd.s32 %v566, %v564
          %vm568 = vcmp.eq.s32.totalorder %v535, %v553
          %vm569 = vcmp.eq.s32.totalorder %v535, %v567
          %v570 = vsel %vm568, -inf, %v505
          %v571 = vsel %vm569, -inf, %v510
          %572 = vmax.xlane.f32.xlu0 %v570
          %v573 = vpop.xlane.xlu0 %572
          %574 = vmax.xlane.f32.xlu0 %v571
          %v575 = vpop.xlane.xlu0 %574
          %v576 = vsub.f32 %v514, %v573
          %v577 = vsub.f32 %v516, %v575
          %v578 = vsub.f32 %v505, %v514
          %v579 = vsub.f32 %v510, %v516
          %v580 = vmul.f32 %v578, 1.442695
          %v581 = vpow.pop %v580
          %v582 = vmul.f32 %v579, 1.442695
          %v583 = vpow.pop %v582
          %584 = vadd.xlane.f32.xlu0 %v581
          %v585 = vpop.xlane.xlu0 %584
          %586 = vadd.xlane.f32.xlu0 %v583
          %v587 = vpop.xlane.xlu0 %586
          %v588 = vrcp.pop %v585
          %v589 = vrcp.pop %v587
          %v590 = vmul.f32 %v581, %v588
          %v591 = vmul.f32 %v583, %v589
          %v592 = vld [vmem:[#allocation3] sm:$0x1]
          %v593 = vmul.f32 %v590, %v532
          %v594 = vmul.f32 %v591, %v533
          %v595 = vadd.f32 %v593, %v594
          %v596 = vrot.slane %v595, 4
          %v597 = vadd.f32 %v595, %v596
          %v598 = vrot.slane %v597, 2
          %v599 = vadd.f32 %v597, %v598
          %v600 = vrot.slane %v599, 1
          %v601 = vadd.f32 %v599, %v600
          %v602 = vadd.f32 %v592, %v601
          %603 = vst [vmem:[#allocation3] sm:$0x1] %v602
          %v604 = vld [vmem:[#allocation4] sm:$0x1]
          %v605 = vmul.f32 %v576, %v532
          %v606 = vmul.f32 %v577, %v533
          %v607 = vadd.f32 %v605, %v606
          %v608 = vrot.slane %v607, 4
          %v609 = vadd.f32 %v607, %v608
          %v610 = vrot.slane %v609, 2
          %v611 = vadd.f32 %v609, %v610
          %v612 = vrot.slane %v611, 1
          %v613 = vadd.f32 %v611, %v612
          %v614 = vadd.f32 %v604, %v613
          %vm615 = vcmask 0
          %616 = vst.msk [vmem:[#allocation4] sm:$0x1] %vm615, %v614
          %v617 = vld [vmem:[#allocation5] sm:$0x1]
          %v618 = vmul.f32 %v514, %v532
          %v619 = vmul.f32 %v516, %v533
          %v620 = vadd.f32 %v618, %v619
          %v621 = vrot.slane %v620, 4
          %v622 = vadd.f32 %v620, %v621
          %v623 = vrot.slane %v622, 2
          %v624 = vadd.f32 %v622, %v623
          %v625 = vrot.slane %v624, 1
          %v626 = vadd.f32 %v624, %v625
          %v627 = vadd.f32 %v617, %v626
          %628 = vst.msk [vmem:[#allocation5] sm:$0x1] %vm615, %v627
        $region44: #{tpu_custom_call.1} parent=27 // pred_fallthru
          _
        %s629 = sadd.s32 %s517, 16
        %p630 = scmp.gt.s32.totalorder %s629, 32
        // Predicated region
        $region45: #{tpu_custom_call.1} parent=27 // pred_check
          %p631 = pneg %p630
        $region46: #{tpu_custom_call.1} parent=27 // pred_check_branch
          %633 = sbr.rel (%p631) target = $region48
        $region47: #{tpu_custom_call.1} parent=27 // pred_region
          %vm634 = vcmp.ge.s32.totalorder %v522, 32
          %vm635 = vcmp.ge.s32.totalorder %v523, 32
          %v636 = vsel %vm634, 1, 0
          %v637 = vsel %vm635, 1, 0
          %v638 = vcvt.s32.f32 %v636
          %v639 = vcvt.s32.f32 %v637
          %v640 = vld [vmem:[#allocation6] sm:$0x1]
          %v641 = vmul.f32 %v514, %v638
          %v642 = vmul.f32 %v516, %v639
          %v643 = vadd.f32 %v641, %v642
          %v644 = vrot.slane %v643, 4
          %v645 = vadd.f32 %v643, %v644
          %v646 = vrot.slane %v645, 2
          %v647 = vadd.f32 %v645, %v646
          %v648 = vrot.slane %v647, 1
          %v649 = vadd.f32 %v647, %v648
          %v650 = vadd.f32 %v640, %v649
          %vm651 = vcmask 0
          %652 = vst.msk [vmem:[#allocation6] sm:$0x1] %vm651, %v650
        $region48: #{tpu_custom_call.1} parent=27 // pred_fallthru
          _
        %p653 = scmp.eq.s32.totalorder %s18, 3
        // Predicated region
        $region49: #{tpu_custom_call.1} parent=27 // pred_check
          %p654 = pneg %p653
        $region50: #{tpu_custom_call.1} parent=27 // pred_check_branch
          %656 = sbr.rel (%p654) target = $region52
        $region51: #{tpu_custom_call.1} parent=27 // pred_region
          %v657 = vld [vmem:[#allocation3] sm:$0x1]
          %v658 = vmul.f32 %v657, 0.03125
          %v659 = vmul.f32 %v658, %v658
          %vm660 = vcmask 1040384
          %v661 = vsel %vm660, %v659, 0.0
          %662 = vadd.xlane.f32.xlu0 %v661
          %v663 = vpop.xlane.xlu0 %662
          %v664 = vrsqrt.pop %v663
          %v665 = vmul.f32 %v663, %v664
          %vm666 = vcmp.eq.f32.partialorder %v663, inf
          %v667 = vsel %vm666, %v663, %v665
          %vm668 = vcmp.eq.f32.partialorder %v663, 0.0
          %v669 = vand.u32 %v663, 2147483648
          %v670 = vsel %vm668, %v669, %v667
          %v671 = vld [vmem:[#allocation4] sm:$0x1]
          %v672 = vmul.f32 %v671, 0.03125
          %v673 = vsub.f32 2.0, %v672
          %v674 = vld [vmem:[#allocation5] sm:$0x1]
          %v675 = vmul.f32 %v674, 0.03125
          %v676 = vsub.f32 2.0, %v675
          %v677 = vld [vmem:[#allocation6] sm:$0x1]
          %v678 = vmul.f32 %v677, 0.03125
          %v679 = vadd.f32 %v676, %v678
          %v680 = vmul.f32 %v670, 0.5
          %vm681 = vcmp.eq.s32.totalorder %v519, 0
          %vm682 = vcmp.eq.s32.totalorder %v519, 1
          %vm683 = vcmp.eq.s32.totalorder %v519, 2
          %v684 = vlaneseq
          %v685 = vshrl.u32 %v684, 7
          %v686 = vsub.s32 0, %v685
          %v687 = vrot.slane %v680, %v686
          %v688 = vsel %vm683, %v687, 0.0
          %v690 = vlaneseq
          %v691 = vshrl.u32 %v690, 7
          %v692 = vsub.s32 0, %v691
          %v693 = vrot.slane %v679, %v692
          %694 = vset.pattern.permute.xlu0 0
          %695 = vperm.xlu0 %694, %v693
          %v696 = vpop.permute.xlu0 %695
          %v698 = vsel %vm682, %v696, %v688
          %v700 = vlaneseq
          %v701 = vshrl.u32 %v700, 7
          %v702 = vsub.s32 0, %v701
          %v703 = vrot.slane %v673, %v702
          %704 = vset.pattern.permute.xlu0 0
          %705 = vperm.xlu0 %704, %v703
          %v706 = vpop.permute.xlu0 %705
          %v708 = vsel %vm681, %v706, %v698
          %709 = vst [vmem:[#allocation12] sm:$0xff] %v708
        $region52: #{tpu_custom_call.1} parent=27 // pred_fallthru
          _
        // Predicated region
        $region53: #{tpu_custom_call.1} parent=27 // pred_check
          %p710 = pneg %p78
        $region54: #{tpu_custom_call.1} parent=27 // pred_check_branch
          %712 = sbr.rel (%p710) target = $region56
        $region55: #{tpu_custom_call.1} parent=27 // pred_region
          %s714 = ssub.s32 128, 128
          %715 = vsyncadd [#allocation9], %s714
          %s717 = sshll.u32 [#allocation12], 4
          %s718 = int_to_ptr.vmem [resolvable:$true] %s717
          %720 = dma.vmem_to_hbm [thread:$0]  %s718, 128, %s2, [#allocation9]
        $region56: #{tpu_custom_call.1} parent=27 // pred_fallthru
          _
        // Predicated region
        $region57: #{tpu_custom_call.1} parent=27 // pred_check
          %p721 = pneg %p78
        $region58: #{tpu_custom_call.1} parent=27 // pred_check_branch
          %723 = sbr.rel (%p721) target = $region60
        $region59: #{tpu_custom_call.1} parent=27 // pred_region
          %724 = dma.done [#allocation9], 128
        $region60: #{tpu_custom_call.1} parent=27 // pred_fallthru
          _
      $region28: #{tpu_custom_call.1} parent=5 // pred_fallthru
        _
      %p725 = scmp.le.s32.totalorder 2, %s13
      // Predicated region
      $region61: #{tpu_custom_call.1} parent=5 // pred_check
        %p726 = pneg %p725
      $region62: #{tpu_custom_call.1} parent=5 // pred_check_branch
        %728 = sbr.rel (%p726) target = $region64
      $region63: #{tpu_custom_call.1} parent=5 // pred_region
        %s729 = ssub.s32 %s13, 2
      $region64: #{tpu_custom_call.1} parent=5 // pred_fallthru
        _
    $region6: #{tpu_custom_call.1} parent=1 // loop_footer
      %s17 = sadd.s32 1, %s13
    $region7: #{tpu_custom_call.1} parent=1 // loop_footer_branch
      %12 = sbr.rel target = $region3
    $region8: #{tpu_custom_call.1} parent=1 // loop_exit
      _
    %730 = vsyncpa [#allocation8], 1
    %s731 = scalar_lea.sflag [#allocation8], 1
    %732 = vsyncpa %s731, 1
    %733 = vsyncpa [#allocation11], 1
    %734 = vsyncpa [#allocation9], 1
    %s735 = scalar_lea.sflag [#allocation9], 1
    %736 = vsyncpa %s735, 1

</llo_original>
